<compile_context>
chip_gen: v5e
topology: v5e:2x2
jax: 0.10.0
libtpu: 0.0.40
codegen_flags: <defaults>
</compile_context>

<pallas_src>
import functools

import jax
import jax.numpy as jnp
from jax.experimental import pallas as pl
from jax.experimental.pallas import tpu as pltpu


TILE_ROWS = 256      # row tile over the node dimension (output rows)
TILE_K_MAX = 2048    # max reduction (K) tile over the node dimension


def _round_up(x, m):
    return (x + m - 1) // m * m


def _pick_tile_k(n_pad, tile_rows, max_tk=TILE_K_MAX):
    """Largest multiple of tile_rows that divides n_pad and is <= max_tk."""
    best = tile_rows
    t = tile_rows
    limit = min(max_tk, n_pad)
    while t <= limit:
        if n_pad % t == 0:
            best = t
        t += tile_rows
    return best


# ---------------------------------------------------------------------------
# Kernels
# ---------------------------------------------------------------------------

def _xw_kernel(x_ref, w_ref, s_ref):
    # support tile = x_tile @ W   (bf16 in, f32 accumulate on the MXU)
    s_ref[...] = jnp.dot(
        x_ref[...], w_ref[...], preferred_element_type=jnp.float32
    ).astype(s_ref.dtype)


def _agg_kernel(adj_ref, s_ref, b_ref, o_ref, acc_ref):
    # out row-tile = relu( sum_k adj[i,k] @ support[k] + b )
    k = pl.program_id(1)

    @pl.when(k == 0)
    def _():
        acc_ref[...] = jnp.zeros_like(acc_ref)

    acc_ref[...] += jnp.dot(
        adj_ref[...], s_ref[...], preferred_element_type=jnp.float32
    )

    @pl.when(k == pl.num_programs(1) - 1)
    def _():
        o_ref[...] = jnp.maximum(acc_ref[...] + b_ref[...], 0.0).astype(o_ref.dtype)


def _agg_fused_w2_kernel(adj_ref, s_ref, b_ref, w2_ref, o_ref, acc_ref):
    # out row-tile = relu( sum_k adj[i,k] @ support[k] + b ) @ W2
    # (layer-2's x@W fused into layer-1's aggregation epilogue; the extra
    #  (TM,128)@(128,128) matmul hides under the adj DMA stream)
    k = pl.program_id(1)

    @pl.when(k == 0)
    def _():
        acc_ref[...] = jnp.zeros_like(acc_ref)

    acc_ref[...] += jnp.dot(
        adj_ref[...], s_ref[...], preferred_element_type=jnp.float32
    )

    @pl.when(k == pl.num_programs(1) - 1)
    def _():
        h = jnp.maximum(acc_ref[...] + b_ref[...], 0.0).astype(jnp.bfloat16)
        o_ref[...] = jnp.dot(
            h, w2_ref[...], preferred_element_type=jnp.float32
        ).astype(o_ref.dtype)


# ---------------------------------------------------------------------------
# pallas_call wrappers
# ---------------------------------------------------------------------------

def _xw(x, w, *, tile_rows):
    """support = x @ W on pre-padded bf16 operands."""
    n_pad, fin = x.shape
    fout = w.shape[1]
    grid = (n_pad // tile_rows,)

    cost = pl.CostEstimate(
        flops=2 * n_pad * fin * fout,
        transcendentals=0,
        bytes_accessed=2 * (n_pad * fin + fin * fout + n_pad * fout),
    )
    return pl.pallas_call(
        _xw_kernel,
        out_shape=jax.ShapeDtypeStruct((n_pad, fout), jnp.bfloat16),
        grid_spec=pltpu.PrefetchScalarGridSpec(
            num_scalar_prefetch=0,
            grid=grid,
            in_specs=[
                pl.BlockSpec((tile_rows, fin), lambda i: (i, 0)),   # x streamed
                pl.BlockSpec((fin, fout), lambda i: (0, 0),         # W resident,
                             pipeline_mode=pl.Buffered(1)),         # single-buffered
            ],
            out_specs=pl.BlockSpec((tile_rows, fout), lambda i: (i, 0)),
        ),
        compiler_params=pltpu.CompilerParams(
            dimension_semantics=("parallel",)),
        cost_estimate=cost,
    )(x, w)


def _aggregate(adj, support, b, *, w2=None, out_dtype, tile_rows, tile_k):
    """relu(adj @ support + b) [optionally @ W2], K-tiled over the node dim."""
    n_pad = adj.shape[0]
    fin = support.shape[1]
    fout = fin if w2 is None else w2.shape[1]
    grid = (n_pad // tile_rows, n_pad // tile_k)

    adj_spec = pl.BlockSpec((tile_rows, tile_k), lambda i, k: (i, k))
    s_spec = pl.BlockSpec((tile_k, fin), lambda i, k: (k, 0))
    b_spec = pl.BlockSpec((1, fin), lambda i, k: (0, 0),
                          pipeline_mode=pl.Buffered(1))
    out_spec = pl.BlockSpec((tile_rows, fout), lambda i, k: (i, 0))
    scratch = [pltpu.VMEM((tile_rows, fin), jnp.float32)]

    flops = 2 * n_pad * n_pad * fin
    bytes_accessed = (n_pad * n_pad * 2 + n_pad * fin * 2
                      + n_pad * fout * jnp.dtype(out_dtype).itemsize)
    if w2 is not None:
        flops += 2 * n_pad * fin * fout
        bytes_accessed += fin * fout * 2
    cost = pl.CostEstimate(flops=flops, transcendentals=0,
                           bytes_accessed=bytes_accessed)

    compiler_params = pltpu.CompilerParams(
        dimension_semantics=("parallel", "arbitrary"))

    if w2 is None:
        return pl.pallas_call(
            _agg_kernel,
            out_shape=jax.ShapeDtypeStruct((n_pad, fout), out_dtype),
            grid_spec=pltpu.PrefetchScalarGridSpec(
                num_scalar_prefetch=0,
                grid=grid,
                in_specs=[adj_spec, s_spec, b_spec],
                out_specs=out_spec,
                scratch_shapes=scratch,
            ),
            compiler_params=compiler_params,
            cost_estimate=cost,
        )(adj, support, b)

    w2_spec = pl.BlockSpec((fin, fout), lambda i, k: (0, 0),
                           pipeline_mode=pl.Buffered(1))
    return pl.pallas_call(
        _agg_fused_w2_kernel,
        out_shape=jax.ShapeDtypeStruct((n_pad, fout), out_dtype),
        grid_spec=pltpu.PrefetchScalarGridSpec(
            num_scalar_prefetch=0,
            grid=grid,
            in_specs=[adj_spec, s_spec, b_spec, w2_spec],
            out_specs=out_spec,
            scratch_shapes=scratch,
        ),
        compiler_params=compiler_params,
        cost_estimate=cost,
    )(adj, support, b, w2)


# ---------------------------------------------------------------------------
# Encoder forward (eval mode)
# ---------------------------------------------------------------------------

@functools.partial(jax.jit, static_argnames=("tile_rows", "tile_k_max"))
def encoder_forward(x, adj, params, *, tile_rows=None, tile_k_max=TILE_K_MAX):
    """Encoder.forward in eval mode."""
    w1, b1, w2, b2 = params
    n, nfeat = x.shape
    nhid = w1.shape[1]

    # Clamp row tile / node padding for small graphs (16 = bf16 sublane pack).
    if tile_rows is None:
        tile_rows = min(TILE_ROWS, _round_up(n, 16))
    n_pad = _round_up(n, tile_rows)
    tile_k = _pick_tile_k(n_pad, tile_rows, tile_k_max)
    nfeat_p = _round_up(nfeat, 128)
    nhid_p = _round_up(nhid, 128)

    # Zero-pad to lane-dense / tile-aligned shapes; bf16 for MXU operands.
    # NOTE: adj's padded ROWS and COLUMNS must stay zero — padded node rows of
    # the intermediate supports are nonzero (relu(b1) leaks in), and only the
    # zero adj columns keep them from contaminating real nodes.
    xp = jnp.pad(x, ((0, n_pad - n), (0, nfeat_p - nfeat))).astype(jnp.bfloat16)
    adjp = jnp.pad(adj, ((0, n_pad - n), (0, n_pad - n))).astype(jnp.bfloat16)
    w1p = jnp.pad(w1, ((0, nfeat_p - nfeat), (0, nhid_p - nhid))).astype(jnp.bfloat16)
    w2p = jnp.pad(w2, ((0, nhid_p - nhid), (0, nhid_p - nhid))).astype(jnp.bfloat16)
    b1p = jnp.pad(b1, ((0, 0), (0, nhid_p - nhid))).astype(jnp.float32)
    b2p = jnp.pad(b2, ((0, 0), (0, nhid_p - nhid))).astype(jnp.float32)

    # 1) support1 = x @ W1
    s1 = _xw(xp, w1p, tile_rows=tile_rows)
    # 2) support2 = relu(adj @ support1 + b1) @ W2
    #    (dropout is identity in eval mode)
    # TODO(synk): training-mode F.dropout would need pltpu.prng_seed /
    # prng_random_bits masking between the relu and the @W2.
    s2 = _aggregate(adjp, s1, b1p, w2=w2p, out_dtype=jnp.bfloat16,
                    tile_rows=tile_rows, tile_k=tile_k)
    # 3) out = relu(adj @ support2 + b2)
    out = _aggregate(adjp, s2, b2p, out_dtype=jnp.float32,
                     tile_rows=tile_rows, tile_k=tile_k)
    return out[:n, :nhid]


def init_params(key, nfeat, nhid):
    k1, k2, k3, k4 = jax.random.split(key, 4)
    w1 = jax.random.normal(k1, (nfeat, nhid), jnp.float32) * 0.1
    b1 = jax.random.normal(k2, (1, nhid), jnp.float32) * 0.1
    w2 = jax.random.normal(k3, (nhid, nhid), jnp.float32) * 0.1
    b2 = jax.random.normal(k4, (1, nhid), jnp.float32) * 0.1
    return w1, b1, w2, b2


if __name__ == "__main__":
    key = jax.random.PRNGKey(0)
    kx, ka, kp = jax.random.split(key, 3)

    # small, module-consistent shapes: N nodes=8, nfeat=16, nhid=32
    N, NFEAT, NHID = 8, 16, 32
    x = jax.random.normal(kx, (N, NFEAT), jnp.float32)

    # symmetric, row-normalized adjacency (with self-loops), as in GCN usage
    a = (jax.random.uniform(ka, (N, N)) > 0.5).astype(jnp.float32)
    adj = jnp.minimum(a + a.T + jnp.eye(N, dtype=jnp.float32), 1.0)
    adj = adj / jnp.sum(adj, axis=1, keepdims=True)

    params = init_params(kp, NFEAT, NHID)

    out = encoder_forward(x, adj, params)
    jax.block_until_ready(out)

    # pure-JAX f32 reference; bf16 MXU inputs => relaxed tolerance
    w1, b1, w2, b2 = params
    ref = jnp.maximum(adj @ (x @ w1) + b1, 0.0)
    ref = jnp.maximum(adj @ (ref @ w2) + b2, 0.0)
    assert out.shape == ref.shape, "shape mismatch vs reference"
    assert jnp.allclose(out, ref, atol=2e-2, rtol=2e-2), "mismatch vs reference"

    print("KERNEL_OK")
</pallas_src>

<mosaic_0001>
module attributes {stable_mosaic.version = 11 : i64} {
  func.func @_xw_kernel(%arg0: i32, %arg1: memref<16x128xbf16, #tpu.memory_space<vmem>>, %arg2: memref<128x128xbf16, #tpu.memory_space<vmem>>, %arg3: memref<16x128xbf16, #tpu.memory_space<vmem>>) attributes {dimension_semantics = [#tpu.dimension_semantics<parallel>], iteration_bounds = array<i64: 1>, scalar_prefetch = 0 : i64, scratch_operands = 0 : i64, tpu.core_type = #tpu.core_type<tc>, window_params = [{transform_indices = @transform_0, window_bounds = array<i64: 16, 128>}, {pipeline_mode = #tpu.pipeline_mode<synchronous>, transform_indices = @transform_1, window_bounds = array<i64: 128, 128>}, {transform_indices = @transform_2, window_bounds = array<i64: 16, 128>}]} {
    %c0 = arith.constant 0 : index
    %c0_0 = arith.constant 0 : index
    %0 = vector.load %arg1[%c0, %c0_0] : memref<16x128xbf16, #tpu.memory_space<vmem>>, vector<16x128xbf16>
    %c0_1 = arith.constant 0 : index
    %c0_2 = arith.constant 0 : index
    %1 = vector.load %arg2[%c0_1, %c0_2] : memref<128x128xbf16, #tpu.memory_space<vmem>>, vector<128x128xbf16>
    %cst = arith.constant dense<0.000000e+00> : vector<16x128xf32>
    %2 = tpu.matmul %0, %1, %cst {dimension_numbers = #tpu.dot_dimension_numbers<[1], [0], [0], [1], [0, 0, 1, 1], [], []>} : vector<16x128xbf16>, vector<128x128xbf16>, vector<16x128xf32> -> vector<16x128xf32>
    %3 = arith.truncf %2 : vector<16x128xf32> to vector<16x128xbf16>
    %c0_3 = arith.constant 0 : index
    %c0_4 = arith.constant 0 : index
    %4 = vector.load %arg3[%c0_3, %c0_4] : memref<16x128xbf16, #tpu.memory_space<vmem>>, vector<16x128xbf16>
    tpu.vector_store %arg3[%c0_3, %c0_4], %3 {strides = array<i32>} : memref<16x128xbf16, #tpu.memory_space<vmem>>, vector<16x128xbf16>,
    return
  }
  func.func @transform_0(%arg0: i32) -> (i32, i32) {
    %c0_i32 = arith.constant 0 : i32
    %c0_i32_0 = arith.constant 0 : i32
    return %arg0, %c0_i32 : i32, i32
  }
  func.func @transform_1(%arg0: i32) -> (i32, i32) {
    %c0_i32 = arith.constant 0 : i32
    %c0_i32_0 = arith.constant 0 : i32
    %c0_i32_1 = arith.constant 0 : i32
    return %c0_i32, %c0_i32_0 : i32, i32
  }
  func.func @transform_2(%arg0: i32) -> (i32, i32) {
    %c0_i32 = arith.constant 0 : i32
    %c0_i32_0 = arith.constant 0 : i32
    return %arg0, %c0_i32 : i32, i32
  }
}

module attributes {stable_mosaic.version = 11 : i64} {
  func.func @_agg_fused_w2_kernel(%arg0: i32, %arg1: i32, %arg2: memref<16x16xbf16, #tpu.memory_space<vmem>>, %arg3: memref<16x128xbf16, #tpu.memory_space<vmem>>, %arg4: memref<1x128xf32, #tpu.memory_space<vmem>>, %arg5: memref<128x128xbf16, #tpu.memory_space<vmem>>, %arg6: memref<16x128xbf16, #tpu.memory_space<vmem>>, %arg7: memref<16x128xf32, #tpu.memory_space<vmem>>) attributes {dimension_semantics = [#tpu.dimension_semantics<parallel>, #tpu.dimension_semantics<arbitrary>], iteration_bounds = array<i64: 1, 1>, scalar_prefetch = 0 : i64, scratch_operands = 1 : i64, tpu.core_type = #tpu.core_type<tc>, window_params = [{transform_indices = @transform_0, window_bounds = array<i64: 16, 16>}, {transform_indices = @transform_1, window_bounds = array<i64: 16, 128>}, {pipeline_mode = #tpu.pipeline_mode<synchronous>, transform_indices = @transform_2, window_bounds = array<i64: 1, 128>}, {pipeline_mode = #tpu.pipeline_mode<synchronous>, transform_indices = @transform_3, window_bounds = array<i64: 128, 128>}, {transform_indices = @transform_4, window_bounds = array<i64: 16, 128>}]} {
    %c0_i32 = arith.constant 0 : i32
    %0 = arith.cmpi eq, %arg1, %c0_i32 : i32
    %1 = arith.extui %0 : i1 to i32
    %c0_i32_0 = arith.constant 0 : i32
    %2 = arith.cmpi ne, %1, %c0_i32_0 : i32
    scf.if %2 {
      %cst_10 = arith.constant 0.000000e+00 : f32
      %12 = vector.broadcast %cst_10 : f32 to vector<16x128xf32>
      %c0_11 = arith.constant 0 : index
      %c0_12 = arith.constant 0 : index
      %13 = vector.load %arg7[%c0_11, %c0_12] : memref<16x128xf32, #tpu.memory_space<vmem>>, vector<16x128xf32>
      tpu.vector_store %arg7[%c0_11, %c0_12], %12 {strides = array<i32>} : memref<16x128xf32, #tpu.memory_space<vmem>>, vector<16x128xf32>,
    } else {
    }
    %c0 = arith.constant 0 : index
    %c0_1 = arith.constant 0 : index
    %3 = vector.load %arg7[%c0, %c0_1] : memref<16x128xf32, #tpu.memory_space<vmem>>, vector<16x128xf32>
    %c0_2 = arith.constant 0 : index
    %c0_3 = arith.constant 0 : index
    %4 = vector.load %arg2[%c0_2, %c0_3] : memref<16x16xbf16, #tpu.memory_space<vmem>>, vector<16x16xbf16>
    %c0_4 = arith.constant 0 : index
    %c0_5 = arith.constant 0 : index
    %5 = vector.load %arg3[%c0_4, %c0_5] : memref<16x128xbf16, #tpu.memory_space<vmem>>, vector<16x128xbf16>
    %cst = arith.constant dense<0.000000e+00> : vector<16x128xf32>
    %6 = tpu.matmul %4, %5, %cst {dimension_numbers = #tpu.dot_dimension_numbers<[1], [0], [0], [1], [0, 0, 1, 1], [], []>} : vector<16x16xbf16>, vector<16x128xbf16>, vector<16x128xf32> -> vector<16x128xf32>
    %7 = arith.addf %3, %6 : vector<16x128xf32>
    %c0_6 = arith.constant 0 : index
    %c0_7 = arith.constant 0 : index
    %8 = vector.load %arg7[%c0_6, %c0_7] : memref<16x128xf32, #tpu.memory_space<vmem>>, vector<16x128xf32>
    tpu.vector_store %arg7[%c0_6, %c0_7], %7 {strides = array<i32>} : memref<16x128xf32, #tpu.memory_space<vmem>>, vector<16x128xf32>,
    %c0_i32_8 = arith.constant 0 : i32
    %9 = arith.cmpi eq, %arg1, %c0_i32_8 : i32
    %10 = arith.extui %9 : i1 to i32
    %c0_i32_9 = arith.constant 0 : i32
    %11 = arith.cmpi ne, %10, %c0_i32_9 : i32
    scf.if %11 {
      %c0_10 = arith.constant 0 : index
      %c0_11 = arith.constant 0 : index
      %12 = vector.load %arg7[%c0_10, %c0_11] : memref<16x128xf32, #tpu.memory_space<vmem>>, vector<16x128xf32>
      %c0_12 = arith.constant 0 : index
      %c0_13 = arith.constant 0 : index
      %13 = vector.load %arg4[%c0_12, %c0_13] : memref<1x128xf32, #tpu.memory_space<vmem>>, vector<1x128xf32>
      %14 = vector.broadcast %13 : vector<1x128xf32> to vector<16x128xf32>
      %15 = arith.addf %12, %14 : vector<16x128xf32>
      %cst_14 = arith.constant 0.000000e+00 : f32
      %16 = vector.broadcast %cst_14 : f32 to vector<16x128xf32>
      %17 = arith.maximumf %15, %16 : vector<16x128xf32>
      %18 = arith.truncf %17 : vector<16x128xf32> to vector<16x128xbf16>
      %c0_15 = arith.constant 0 : index
      %c0_16 = arith.constant 0 : index
      %19 = vector.load %arg5[%c0_15, %c0_16] : memref<128x128xbf16, #tpu.memory_space<vmem>>, vector<128x128xbf16>
      %cst_17 = arith.constant dense<0.000000e+00> : vector<16x128xf32>
      %20 = tpu.matmul %18, %19, %cst_17 {dimension_numbers = #tpu.dot_dimension_numbers<[1], [0], [0], [1], [0, 0, 1, 1], [], []>} : vector<16x128xbf16>, vector<128x128xbf16>, vector<16x128xf32> -> vector<16x128xf32>
      %21 = arith.truncf %20 : vector<16x128xf32> to vector<16x128xbf16>
      %c0_18 = arith.constant 0 : index
      %c0_19 = arith.constant 0 : index
      %22 = vector.load %arg6[%c0_18, %c0_19] : memref<16x128xbf16, #tpu.memory_space<vmem>>, vector<16x128xbf16>
      tpu.vector_store %arg6[%c0_18, %c0_19], %21 {strides = array<i32>} : memref<16x128xbf16, #tpu.memory_space<vmem>>, vector<16x128xbf16>,
    } else {
    }
    return
  }
  func.func @transform_0(%arg0: i32, %arg1: i32) -> (i32, i32) {
    %c0_i32 = arith.constant 0 : i32
    return %arg0, %arg1 : i32, i32
  }
  func.func @transform_1(%arg0: i32, %arg1: i32) -> (i32, i32) {
    %c0_i32 = arith.constant 0 : i32
    %c0_i32_0 = arith.constant 0 : i32
    return %arg1, %c0_i32 : i32, i32
  }
  func.func @transform_2(%arg0: i32, %arg1: i32) -> (i32, i32) {
    %c0_i32 = arith.constant 0 : i32
    %c0_i32_0 = arith.constant 0 : i32
    %c0_i32_1 = arith.constant 0 : i32
    return %c0_i32, %c0_i32_0 : i32, i32
  }
  func.func @transform_3(%arg0: i32, %arg1: i32) -> (i32, i32) {
    %c0_i32 = arith.constant 0 : i32
    %c0_i32_0 = arith.constant 0 : i32
    %c0_i32_1 = arith.constant 0 : i32
    return %c0_i32, %c0_i32_0 : i32, i32
  }
  func.func @transform_4(%arg0: i32, %arg1: i32) -> (i32, i32) {
    %c0_i32 = arith.constant 0 : i32
    %c0_i32_0 = arith.constant 0 : i32
    return %arg0, %c0_i32 : i32, i32
  }
}

module attributes {stable_mosaic.version = 11 : i64} {
  func.func @_agg_kernel(%arg0: i32, %arg1: i32, %arg2: memref<16x16xbf16, #tpu.memory_space<vmem>>, %arg3: memref<16x128xbf16, #tpu.memory_space<vmem>>, %arg4: memref<1x128xf32, #tpu.memory_space<vmem>>, %arg5: memref<16x128xf32, #tpu.memory_space<vmem>>, %arg6: memref<16x128xf32, #tpu.memory_space<vmem>>) attributes {dimension_semantics = [#tpu.dimension_semantics<parallel>, #tpu.dimension_semantics<arbitrary>], iteration_bounds = array<i64: 1, 1>, scalar_prefetch = 0 : i64, scratch_operands = 1 : i64, tpu.core_type = #tpu.core_type<tc>, window_params = [{transform_indices = @transform_0, window_bounds = array<i64: 16, 16>}, {transform_indices = @transform_1, window_bounds = array<i64: 16, 128>}, {pipeline_mode = #tpu.pipeline_mode<synchronous>, transform_indices = @transform_2, window_bounds = array<i64: 1, 128>}, {transform_indices = @transform_3, window_bounds = array<i64: 16, 128>}]} {
    %c0_i32 = arith.constant 0 : i32
    %0 = arith.cmpi eq, %arg1, %c0_i32 : i32
    %1 = arith.extui %0 : i1 to i32
    %c0_i32_0 = arith.constant 0 : i32
    %2 = arith.cmpi ne, %1, %c0_i32_0 : i32
    scf.if %2 {
      %cst_10 = arith.constant 0.000000e+00 : f32
      %12 = vector.broadcast %cst_10 : f32 to vector<16x128xf32>
      %c0_11 = arith.constant 0 : index
      %c0_12 = arith.constant 0 : index
      %13 = vector.load %arg6[%c0_11, %c0_12] : memref<16x128xf32, #tpu.memory_space<vmem>>, vector<16x128xf32>
      tpu.vector_store %arg6[%c0_11, %c0_12], %12 {strides = array<i32>} : memref<16x128xf32, #tpu.memory_space<vmem>>, vector<16x128xf32>,
    } else {
    }
    %c0 = arith.constant 0 : index
    %c0_1 = arith.constant 0 : index
    %3 = vector.load %arg6[%c0, %c0_1] : memref<16x128xf32, #tpu.memory_space<vmem>>, vector<16x128xf32>
    %c0_2 = arith.constant 0 : index
    %c0_3 = arith.constant 0 : index
    %4 = vector.load %arg2[%c0_2, %c0_3] : memref<16x16xbf16, #tpu.memory_space<vmem>>, vector<16x16xbf16>
    %c0_4 = arith.constant 0 : index
    %c0_5 = arith.constant 0 : index
    %5 = vector.load %arg3[%c0_4, %c0_5] : memref<16x128xbf16, #tpu.memory_space<vmem>>, vector<16x128xbf16>
    %cst = arith.constant dense<0.000000e+00> : vector<16x128xf32>
    %6 = tpu.matmul %4, %5, %cst {dimension_numbers = #tpu.dot_dimension_numbers<[1], [0], [0], [1], [0, 0, 1, 1], [], []>} : vector<16x16xbf16>, vector<16x128xbf16>, vector<16x128xf32> -> vector<16x128xf32>
    %7 = arith.addf %3, %6 : vector<16x128xf32>
    %c0_6 = arith.constant 0 : index
    %c0_7 = arith.constant 0 : index
    %8 = vector.load %arg6[%c0_6, %c0_7] : memref<16x128xf32, #tpu.memory_space<vmem>>, vector<16x128xf32>
    tpu.vector_store %arg6[%c0_6, %c0_7], %7 {strides = array<i32>} : memref<16x128xf32, #tpu.memory_space<vmem>>, vector<16x128xf32>,
    %c0_i32_8 = arith.constant 0 : i32
    %9 = arith.cmpi eq, %arg1, %c0_i32_8 : i32
    %10 = arith.extui %9 : i1 to i32
    %c0_i32_9 = arith.constant 0 : i32
    %11 = arith.cmpi ne, %10, %c0_i32_9 : i32
    scf.if %11 {
      %c0_10 = arith.constant 0 : index
      %c0_11 = arith.constant 0 : index
      %12 = vector.load %arg6[%c0_10, %c0_11] : memref<16x128xf32, #tpu.memory_space<vmem>>, vector<16x128xf32>
      %c0_12 = arith.constant 0 : index
      %c0_13 = arith.constant 0 : index
      %13 = vector.load %arg4[%c0_12, %c0_13] : memref<1x128xf32, #tpu.memory_space<vmem>>, vector<1x128xf32>
      %14 = vector.broadcast %13 : vector<1x128xf32> to vector<16x128xf32>
      %15 = arith.addf %12, %14 : vector<16x128xf32>
      %cst_14 = arith.constant 0.000000e+00 : f32
      %16 = vector.broadcast %cst_14 : f32 to vector<16x128xf32>
      %17 = arith.maximumf %15, %16 : vector<16x128xf32>
      %c0_15 = arith.constant 0 : index
      %c0_16 = arith.constant 0 : index
      %18 = vector.load %arg5[%c0_15, %c0_16] : memref<16x128xf32, #tpu.memory_space<vmem>>, vector<16x128xf32>
      tpu.vector_store %arg5[%c0_15, %c0_16], %17 {strides = array<i32>} : memref<16x128xf32, #tpu.memory_space<vmem>>, vector<16x128xf32>,
    } else {
    }
    return
  }
  func.func @transform_0(%arg0: i32, %arg1: i32) -> (i32, i32) {
    %c0_i32 = arith.constant 0 : i32
    return %arg0, %arg1 : i32, i32
  }
  func.func @transform_1(%arg0: i32, %arg1: i32) -> (i32, i32) {
    %c0_i32 = arith.constant 0 : i32
    %c0_i32_0 = arith.constant 0 : i32
    return %arg1, %c0_i32 : i32, i32
  }
  func.func @transform_2(%arg0: i32, %arg1: i32) -> (i32, i32) {
    %c0_i32 = arith.constant 0 : i32
    %c0_i32_0 = arith.constant 0 : i32
    %c0_i32_1 = arith.constant 0 : i32
    return %c0_i32, %c0_i32_0 : i32, i32
  }
  func.func @transform_3(%arg0: i32, %arg1: i32) -> (i32, i32) {
    %c0_i32 = arith.constant 0 : i32
    %c0_i32_0 = arith.constant 0 : i32
    return %arg0, %c0_i32 : i32, i32
  }
}

</mosaic_0001>

<llo_original>
// kernel: encoder_forward.3
$region0: #{encoder_forward.3}
  #allocation0 [shape = 'u32[]', space=smem, size = 0x4, offset = 0x4, fixed_abs, tag = 'smem constant byte address 0x4 - core index']
  #allocation1 [shape = 'u32[72,128]{1,0:T(1,128)}', space=vmem, size = 0x9000, scoped, tag = 'internal scratch']
  %s0 = inlined_call_operand.vmem [shape: bf16[16,128], index: 0, kind: input, shape index: {}]
  %s1 = inlined_call_operand.vmem [shape: bf16[128,128], index: 1, kind: input, shape index: {}]
  %s2 = inlined_call_operand.vmem [shape: bf16[16,128], index: 2, kind: output, shape index: {}]
  %s3 = sld [smem:[#allocation0]]
  $region18: #{encoder_forward.3} parent=0
    _
  %s5 = ssub.s32 1, %s3
  %s6 = scalar_select 0, %s5, %s3
  // Predicated region
  $region2: #{encoder_forward.3} parent=0 // pred_check
    _
  $region3: #{encoder_forward.3} parent=0 // pred_check_branch
    %8 = sbr.rel (0) target = $region5
  $region4: #{encoder_forward.3} parent=0 // pred_region
    _
  $region5: #{encoder_forward.3} parent=0 // pred_fallthru
    _
  // Predicated region
  $region6: #{encoder_forward.3} parent=0 // pred_check
    _
  $region7: #{encoder_forward.3} parent=0 // pred_check_branch
    %10 = sbr.rel (0) target = $region9
  $region8: #{encoder_forward.3} parent=0 // pred_region
    _
  $region9: #{encoder_forward.3} parent=0 // pred_fallthru
    _
  %v11 = vld [vmem:[%s0] sm:$0xf]
  %v12 = vld [vmem:[%s0 + $0x4] sm:$0xf]
  %v13 = vld [vmem:[%s1] sm:$0xf]
  %v14 = vld [vmem:[%s1 + $0x4] sm:$0xf]
  %v15 = vld [vmem:[%s1 + $0x8] sm:$0xf]
  %v16 = vld [vmem:[%s1 + $0xc] sm:$0xf]
  %v17 = vld [vmem:[%s1 + $0x10] sm:$0xf]
  %v18 = vld [vmem:[%s1 + $0x14] sm:$0xf]
  %v19 = vld [vmem:[%s1 + $0x18] sm:$0xf]
  %v20 = vld [vmem:[%s1 + $0x1c] sm:$0xf]
  %v21 = vld [vmem:[%s1 + $0x20] sm:$0xf]
  %v22 = vld [vmem:[%s1 + $0x24] sm:$0xf]
  %v23 = vld [vmem:[%s1 + $0x28] sm:$0xf]
  %v24 = vld [vmem:[%s1 + $0x2c] sm:$0xf]
  %v25 = vld [vmem:[%s1 + $0x30] sm:$0xf]
  %v26 = vld [vmem:[%s1 + $0x34] sm:$0xf]
  %v27 = vld [vmem:[%s1 + $0x38] sm:$0xf]
  %v28 = vld [vmem:[%s1 + $0x3c] sm:$0xf]
  %v31 = vunpack.c.l.b16 %v11
  %v32 = vunpack.c.l.b16 %v12
  %v33 = vpack.c.b16 %v32, %v31
  %v51 = vunpack.c.l.b16 %v13
  %v52 = vunpack.c.l.b16 %v14
  %v53 = vunpack.c.l.b16 %v15
  %v54 = vunpack.c.l.b16 %v16
  %v55 = vunpack.c.l.b16 %v17
  %v56 = vunpack.c.l.b16 %v18
  %v57 = vunpack.c.l.b16 %v19
  %v58 = vunpack.c.l.b16 %v20
  %v59 = vunpack.c.l.b16 %v21
  %v60 = vunpack.c.l.b16 %v22
  %v61 = vunpack.c.l.b16 %v23
  %v62 = vunpack.c.l.b16 %v24
  %v63 = vunpack.c.l.b16 %v25
  %v64 = vunpack.c.l.b16 %v26
  %v65 = vunpack.c.l.b16 %v27
  %v66 = vunpack.c.l.b16 %v28
  %v67 = vpack.c.b16 %v52, %v51
  %v68 = vpack.c.b16 %v54, %v53
  %v69 = vpack.c.b16 %v56, %v55
  %v70 = vpack.c.b16 %v58, %v57
  %v71 = vpack.c.b16 %v60, %v59
  %v72 = vpack.c.b16 %v62, %v61
  %v73 = vpack.c.b16 %v64, %v63
  %v74 = vpack.c.b16 %v66, %v65
  %83 = vmatpush.bf16.msra.mxu0 %v74
  %84 = vmatpush.bf16.msra.mxu0 %v73
  %85 = vmatpush.bf16.msra.mxu0 %v72
  %86 = vmatpush.bf16.msra.mxu0 %v71
  %87 = vmatpush.bf16.msra.mxu0 %v70
  %88 = vmatpush.bf16.msra.mxu0 %v69
  %89 = vmatpush.bf16.msra.mxu0 %v68
  %90 = vmatpush.bf16.msra.mxu0 %v67
  %91 = vmatmul.bf16.gmra.mxu0 %v33
  %v92 = vpop.f32.mrf.mxu0
  %v93 = vadd.f32 0.0, %v92
  %v94 = vpop.f32.mrf.mxu0
  %v95 = vadd.f32 0.0, %v94
  %96 = vdwg.mxu0
  %v97 = vpack.c.bf16 %v93, %v93
  %v98 = vpack.c.bf16 %v95, %v95
  %99 = vst [vmem:[%s2] sm:$0xf] %v97
  %100 = vst [vmem:[%s2 + $0x4] sm:$0xf] %v98
  // Predicated region
  $region10: #{encoder_forward.3} parent=0 // pred_check
    _
  $region11: #{encoder_forward.3} parent=0 // pred_check_branch
    %102 = sbr.rel (0) target = $region13
  $region12: #{encoder_forward.3} parent=0 // pred_region
    _
  $region13: #{encoder_forward.3} parent=0 // pred_fallthru
    _
  // Predicated region
  $region14: #{encoder_forward.3} parent=0 // pred_check
    _
  $region15: #{encoder_forward.3} parent=0 // pred_check_branch
    %104 = sbr.rel (0) target = $region17
  $region16: #{encoder_forward.3} parent=0 // pred_region
    _
  $region17: #{encoder_forward.3} parent=0 // pred_fallthru
    _

// kernel: encoder_forward.4
$region0: #{encoder_forward.4}
  #allocation0 [shape = 'u32[]', space=smem, size = 0x4, offset = 0x4, fixed_abs, tag = 'smem constant byte address 0x4 - core index']
  #allocation1 [shape = 'u32[72,128]{1,0:T(1,128)}', space=vmem, size = 0x9000, scoped, tag = 'internal scratch']
  #allocation2 [shape = 'f32[16,128]{1,0:T(8,128)}', space=vmem, size = 0x2000, scoped, tag = 'scratch operand']
  %s0 = inlined_call_operand.vmem [shape: bf16[16,16], index: 0, kind: input, shape index: {}]
  %s1 = inlined_call_operand.vmem [shape: bf16[16,128], index: 1, kind: input, shape index: {}]
  %s2 = inlined_call_operand.vmem [shape: f32[1,128], index: 2, kind: input, shape index: {}]
  %s3 = inlined_call_operand.vmem [shape: bf16[128,128], index: 3, kind: input, shape index: {}]
  %s4 = inlined_call_operand.vmem [shape: bf16[16,128], index: 4, kind: output, shape index: {}]
  %s5 = sld [smem:[#allocation0]]
  $region34: #{encoder_forward.4} parent=0
    _
  %s7 = ssub.s32 1, %s5
  %s8 = scalar_select 0, %s7, %s5
  // Predicated region
  $region2: #{encoder_forward.4} parent=0 // pred_check
    _
  $region3: #{encoder_forward.4} parent=0 // pred_check_branch
    %10 = sbr.rel (0) target = $region5
  $region4: #{encoder_forward.4} parent=0 // pred_region
    _
  $region5: #{encoder_forward.4} parent=0 // pred_fallthru
    _
  // Predicated region
  $region6: #{encoder_forward.4} parent=0 // pred_check
    _
  $region7: #{encoder_forward.4} parent=0 // pred_check_branch
    %12 = sbr.rel (0) target = $region9
  $region8: #{encoder_forward.4} parent=0 // pred_region
    _
  $region9: #{encoder_forward.4} parent=0 // pred_fallthru
    _
  // Predicated region
  $region10: #{encoder_forward.4} parent=0 // pred_check
    _
  $region11: #{encoder_forward.4} parent=0 // pred_check_branch
    %14 = sbr.rel (0) target = $region13
  $region12: #{encoder_forward.4} parent=0 // pred_region
    _
  $region13: #{encoder_forward.4} parent=0 // pred_fallthru
    _
  // Predicated region
  $region14: #{encoder_forward.4} parent=0 // pred_check
    _
  $region15: #{encoder_forward.4} parent=0 // pred_check_branch
    %16 = sbr.rel (0) target = $region17
  $region16: #{encoder_forward.4} parent=0 // pred_region
    _
  $region17: #{encoder_forward.4} parent=0 // pred_fallthru
    _
  %p18 = scmp.eq.s32.totalorder 0, 0
  // Predicated region
  $region18: #{encoder_forward.4} parent=0 // pred_check
    %p19 = pneg %p18
  $region19: #{encoder_forward.4} parent=0 // pred_check_branch
    %21 = sbr.rel (%p19) target = $region21
  $region20: #{encoder_forward.4} parent=0 // pred_region
    %22 = vst [vmem:[#allocation2] sm:$0xff] 0.0
    %23 = vst [vmem:[#allocation2 + $0x8] sm:$0xff] 0.0
  $region21: #{encoder_forward.4} parent=0 // pred_fallthru
    _
  %v24 = vld [vmem:[#allocation2] sm:$0xff]
  %v25 = vld [vmem:[#allocation2 + $0x8] sm:$0xff]
  %v26 = vld [vmem:[%s0] sm:$0xf]
  %v27 = vld [vmem:[%s0 + $0x4] sm:$0xf]
  %v28 = vld [vmem:[%s1] sm:$0xf]
  %v29 = vld [vmem:[%s1 + $0x4] sm:$0xf]
  %v32 = vunpack.c.l.b16 %v26
  %v33 = vunpack.c.l.b16 %v27
  %v34 = vpack.c.b16 %v33, %v32
  %v37 = vunpack.c.l.b16 %v28
  %v38 = vunpack.c.l.b16 %v29
  %v39 = vpack.c.b16 %v38, %v37
  %vm41 = vcmask 130048
  %v43 = vsel %vm41, %v34, 0
  %45 = vmatpush.bf16.msra.mxu0 0
  %46 = vmatpush.bf16.msra.mxu0 0
  %47 = vmatpush.bf16.msra.mxu0 0
  %48 = vmatpush.bf16.msra.mxu0 0
  %49 = vmatpush.bf16.msra.mxu0 0
  %50 = vmatpush.bf16.msra.mxu0 0
  %51 = vmatpush.bf16.msra.mxu0 0
  %52 = vmatpush.bf16.msra.mxu0 %v39
  %53 = vmatmul.bf16.gmra.mxu0 %v43
  %v54 = vpop.f32.mrf.mxu0
  %v55 = vadd.f32 0.0, %v54
  %v56 = vpop.f32.mrf.mxu0
  %v57 = vadd.f32 0.0, %v56
  %58 = vdwg.mxu0
  %v59 = vadd.f32 %v24, %v55
  %v60 = vadd.f32 %v25, %v57
  %61 = vst [vmem:[#allocation2] sm:$0xff] %v59
  %62 = vst [vmem:[#allocation2 + $0x8] sm:$0xff] %v60
  // Predicated region
  $region22: #{encoder_forward.4} parent=0 // pred_check
    %p63 = pneg %p18
  $region23: #{encoder_forward.4} parent=0 // pred_check_branch
    %65 = sbr.rel (%p63) target = $region25
  $region24: #{encoder_forward.4} parent=0 // pred_region
    %v66 = vld [vmem:[#allocation2] sm:$0xff]
    %v67 = vld [vmem:[#allocation2 + $0x8] sm:$0xff]
    %v68 = vld [vmem:[%s2] sm:$0x1]
    %v70 = vperm.slane %v68, 0
    %v72 = vadd.f32 %v66, %v70
    %v73 = vadd.f32 %v67, %v70
    %v74 = vmax.f32 %v72, 0.0
    %v75 = vmax.f32 %v73, 0.0
    %v76 = vpack.c.bf16 %v75, %v74
    %v77 = vld [vmem:[%s3] sm:$0xf]
    %v78 = vld [vmem:[%s3 + $0x4] sm:$0xf]
    %v79 = vld [vmem:[%s3 + $0x8] sm:$0xf]
    %v80 = vld [vmem:[%s3 + $0xc] sm:$0xf]
    %v81 = vld [vmem:[%s3 + $0x10] sm:$0xf]
    %v82 = vld [vmem:[%s3 + $0x14] sm:$0xf]
    %v83 = vld [vmem:[%s3 + $0x18] sm:$0xf]
    %v84 = vld [vmem:[%s3 + $0x1c] sm:$0xf]
    %v85 = vld [vmem:[%s3 + $0x20] sm:$0xf]
    %v86 = vld [vmem:[%s3 + $0x24] sm:$0xf]
    %v87 = vld [vmem:[%s3 + $0x28] sm:$0xf]
    %v88 = vld [vmem:[%s3 + $0x2c] sm:$0xf]
    %v89 = vld [vmem:[%s3 + $0x30] sm:$0xf]
    %v90 = vld [vmem:[%s3 + $0x34] sm:$0xf]
    %v91 = vld [vmem:[%s3 + $0x38] sm:$0xf]
    %v92 = vld [vmem:[%s3 + $0x3c] sm:$0xf]
    %v109 = vunpack.c.l.b16 %v77
    %v110 = vunpack.c.l.b16 %v78
    %v111 = vunpack.c.l.b16 %v79
    %v112 = vunpack.c.l.b16 %v80
    %v113 = vunpack.c.l.b16 %v81
    %v114 = vunpack.c.l.b16 %v82
    %v115 = vunpack.c.l.b16 %v83
    %v116 = vunpack.c.l.b16 %v84
    %v117 = vunpack.c.l.b16 %v85
    %v118 = vunpack.c.l.b16 %v86
    %v119 = vunpack.c.l.b16 %v87
    %v120 = vunpack.c.l.b16 %v88
    %v121 = vunpack.c.l.b16 %v89
    %v122 = vunpack.c.l.b16 %v90
    %v123 = vunpack.c.l.b16 %v91
    %v124 = vunpack.c.l.b16 %v92
    %v125 = vpack.c.b16 %v110, %v109
    %v126 = vpack.c.b16 %v112, %v111
    %v127 = vpack.c.b16 %v114, %v113
    %v128 = vpack.c.b16 %v116, %v115
    %v129 = vpack.c.b16 %v118, %v117
    %v130 = vpack.c.b16 %v120, %v119
    %v131 = vpack.c.b16 %v122, %v121
    %v132 = vpack.c.b16 %v124, %v123
    %141 = vmatpush.bf16.msra.mxu0 %v132
    %142 = vmatpush.bf16.msra.mxu0 %v131
    %143 = vmatpush.bf16.msra.mxu0 %v130
    %144 = vmatpush.bf16.msra.mxu0 %v129
    %145 = vmatpush.bf16.msra.mxu0 %v128
    %146 = vmatpush.bf16.msra.mxu0 %v127
    %147 = vmatpush.bf16.msra.mxu0 %v126
    %148 = vmatpush.bf16.msra.mxu0 %v125
    %149 = vmatmul.bf16.gmra.mxu0 %v76
    %v150 = vpop.f32.mrf.mxu0
    %v151 = vadd.f32 0.0, %v150
    %v152 = vpop.f32.mrf.mxu0
    %v153 = vadd.f32 0.0, %v152
    %154 = vdwg.mxu0
    %v155 = vpack.c.bf16 %v151, %v151
    %v156 = vpack.c.bf16 %v153, %v153
    %157 = vst [vmem:[%s4] sm:$0xf] %v155
    %158 = vst [vmem:[%s4 + $0x4] sm:$0xf] %v156
  $region25: #{encoder_forward.4} parent=0 // pred_fallthru
    _
  // Predicated region
  $region26: #{encoder_forward.4} parent=0 // pred_check
    _
  $region27: #{encoder_forward.4} parent=0 // pred_check_branch
    %160 = sbr.rel (0) target = $region29
  $region28: #{encoder_forward.4} parent=0 // pred_region
    _
  $region29: #{encoder_forward.4} parent=0 // pred_fallthru
    _
  // Predicated region
  $region30: #{encoder_forward.4} parent=0 // pred_check
    _
  $region31: #{encoder_forward.4} parent=0 // pred_check_branch
    %162 = sbr.rel (0) target = $region33
  $region32: #{encoder_forward.4} parent=0 // pred_region
    _
  $region33: #{encoder_forward.4} parent=0 // pred_fallthru
    _

// kernel: encoder_forward.5
$region0: #{encoder_forward.5}
  #allocation0 [shape = 'u32[]', space=smem, size = 0x4, offset = 0x4, fixed_abs, tag = 'smem constant byte address 0x4 - core index']
  #allocation1 [shape = 'u32[72,128]{1,0:T(1,128)}', space=vmem, size = 0x9000, scoped, tag = 'internal scratch']
  #allocation2 [shape = 'f32[16,128]{1,0:T(8,128)}', space=vmem, size = 0x2000, scoped, tag = 'scratch operand']
  %s0 = inlined_call_operand.vmem [shape: bf16[16,16], index: 0, kind: input, shape index: {}]
  %s1 = inlined_call_operand.vmem [shape: bf16[16,128], index: 1, kind: input, shape index: {}]
  %s2 = inlined_call_operand.vmem [shape: f32[1,128], index: 2, kind: input, shape index: {}]
  %s3 = inlined_call_operand.vmem [shape: f32[16,128], index: 3, kind: output, shape index: {}]
  %s4 = sld [smem:[#allocation0]]
  $region30: #{encoder_forward.5} parent=0
    _
  %s6 = ssub.s32 1, %s4
  %s7 = scalar_select 0, %s6, %s4
  // Predicated region
  $region2: #{encoder_forward.5} parent=0 // pred_check
    _
  $region3: #{encoder_forward.5} parent=0 // pred_check_branch
    %9 = sbr.rel (0) target = $region5
  $region4: #{encoder_forward.5} parent=0 // pred_region
    _
  $region5: #{encoder_forward.5} parent=0 // pred_fallthru
    _
  // Predicated region
  $region6: #{encoder_forward.5} parent=0 // pred_check
    _
  $region7: #{encoder_forward.5} parent=0 // pred_check_branch
    %11 = sbr.rel (0) target = $region9
  $region8: #{encoder_forward.5} parent=0 // pred_region
    _
  $region9: #{encoder_forward.5} parent=0 // pred_fallthru
    _
  // Predicated region
  $region10: #{encoder_forward.5} parent=0 // pred_check
    _
  $region11: #{encoder_forward.5} parent=0 // pred_check_branch
    %13 = sbr.rel (0) target = $region13
  $region12: #{encoder_forward.5} parent=0 // pred_region
    _
  $region13: #{encoder_forward.5} parent=0 // pred_fallthru
    _
  %p15 = scmp.eq.s32.totalorder 0, 0
  // Predicated region
  $region14: #{encoder_forward.5} parent=0 // pred_check
    %p16 = pneg %p15
  $region15: #{encoder_forward.5} parent=0 // pred_check_branch
    %18 = sbr.rel (%p16) target = $region17
  $region16: #{encoder_forward.5} parent=0 // pred_region
    %19 = vst [vmem:[#allocation2] sm:$0xff] 0.0
    %20 = vst [vmem:[#allocation2 + $0x8] sm:$0xff] 0.0
  $region17: #{encoder_forward.5} parent=0 // pred_fallthru
    _
  %v21 = vld [vmem:[#allocation2] sm:$0xff]
  %v22 = vld [vmem:[#allocation2 + $0x8] sm:$0xff]
  %v23 = vld [vmem:[%s0] sm:$0xf]
  %v24 = vld [vmem:[%s0 + $0x4] sm:$0xf]
  %v25 = vld [vmem:[%s1] sm:$0xf]
  %v26 = vld [vmem:[%s1 + $0x4] sm:$0xf]
  %v29 = vunpack.c.l.b16 %v23
  %v30 = vunpack.c.l.b16 %v24
  %v31 = vpack.c.b16 %v30, %v29
  %v34 = vunpack.c.l.b16 %v25
  %v35 = vunpack.c.l.b16 %v26
  %v36 = vpack.c.b16 %v35, %v34
  %vm38 = vcmask 130048
  %v40 = vsel %vm38, %v31, 0
  %42 = vmatpush.bf16.msra.mxu0 0
  %43 = vmatpush.bf16.msra.mxu0 0
  %44 = vmatpush.bf16.msra.mxu0 0
  %45 = vmatpush.bf16.msra.mxu0 0
  %46 = vmatpush.bf16.msra.mxu0 0
  %47 = vmatpush.bf16.msra.mxu0 0
  %48 = vmatpush.bf16.msra.mxu0 0
  %49 = vmatpush.bf16.msra.mxu0 %v36
  %50 = vmatmul.bf16.gmra.mxu0 %v40
  %v51 = vpop.f32.mrf.mxu0
  %v52 = vadd.f32 0.0, %v51
  %v53 = vpop.f32.mrf.mxu0
  %v54 = vadd.f32 0.0, %v53
  %55 = vdwg.mxu0
  %v56 = vadd.f32 %v21, %v52
  %v57 = vadd.f32 %v22, %v54
  %58 = vst [vmem:[#allocation2] sm:$0xff] %v56
  %59 = vst [vmem:[#allocation2 + $0x8] sm:$0xff] %v57
  // Predicated region
  $region18: #{encoder_forward.5} parent=0 // pred_check
    %p60 = pneg %p15
  $region19: #{encoder_forward.5} parent=0 // pred_check_branch
    %62 = sbr.rel (%p60) target = $region21
  $region20: #{encoder_forward.5} parent=0 // pred_region
    %v63 = vld [vmem:[#allocation2] sm:$0xff]
    %v64 = vld [vmem:[#allocation2 + $0x8] sm:$0xff]
    %v65 = vld [vmem:[%s2] sm:$0x1]
    %v67 = vperm.slane %v65, 0
    %v69 = vadd.f32 %v63, %v67
    %v70 = vadd.f32 %v64, %v67
    %v71 = vmax.f32 %v69, 0.0
    %v72 = vmax.f32 %v70, 0.0
    %73 = vst [vmem:[%s3] sm:$0xff] %v71
    %74 = vst [vmem:[%s3 + $0x8] sm:$0xff] %v72
  $region21: #{encoder_forward.5} parent=0 // pred_fallthru
    _
  // Predicated region
  $region22: #{encoder_forward.5} parent=0 // pred_check
    _
  $region23: #{encoder_forward.5} parent=0 // pred_check_branch
    %76 = sbr.rel (0) target = $region25
  $region24: #{encoder_forward.5} parent=0 // pred_region
    _
  $region25: #{encoder_forward.5} parent=0 // pred_fallthru
    _
  // Predicated region
  $region26: #{encoder_forward.5} parent=0 // pred_check
    _
  $region27: #{encoder_forward.5} parent=0 // pred_check_branch
    %78 = sbr.rel (0) target = $region29
  $region28: #{encoder_forward.5} parent=0 // pred_region
    _
  $region29: #{encoder_forward.5} parent=0 // pred_fallthru
    _

</llo_original>
